<compile_context>
chip_gen: v7x
topology: tpu7x:2x2x1
jax: 0.10.0
libtpu: 0.0.40
codegen_flags: <defaults>
</compile_context>

<pallas_src>
import jax
import jax.numpy as jnp
from jax.experimental import pallas as pl
from jax.experimental.pallas import tpu as pltpu

_LANE = 128
_SUBLANE = 8


def _round_up(x, m):
    return ((x + m - 1) // m) * m


def _vmem_capacity_bytes():
    # Generation-aware VMEM size (v5e/v6e: 128 MiB, v7x: 64 MiB per TC); safe fallback.
    try:
        info = pltpu.get_tpu_info()
        return int(getattr(info, "vmem_capacity_bytes", 64 * 1024 * 1024))
    except Exception:
        return 64 * 1024 * 1024


def _choose_tile_n(N, F_pad, out_pad, in_bytes, out_bytes, vmem_budget):
    """Largest row-tile whose double-buffered working set fits the VMEM budget."""
    # per-row bytes, double-buffered: 3 row streams + norm (lane-padded to 128) + output tile
    per_row = 2 * (3 * F_pad * in_bytes + _LANE * 4 + out_pad * out_bytes)
    # resident-ish blocks: 2 weight tiles (double-buffered) + bias
    fixed = 2 * (2 * F_pad * out_pad * in_bytes) + 2 * _SUBLANE * out_pad * 4
    avail = max(vmem_budget - fixed, per_row * _LANE)
    tile = int(avail // per_row)
    tile = max(_LANE, min(tile, 1024))
    tile = (tile // _LANE) * _LANE
    # don't over-tile small problems (demo-sized N)
    n_pad_min = _round_up(N, _LANE)
    tile = min(tile, n_pad_min)
    # keep enough grid steps so v7x's 2 TensorCores both get work on large N
    while tile > 256 and pl.cdiv(n_pad_min, tile) < 4:
        tile = max(_LANE, (tile // 2 // _LANE) * _LANE)
    return tile


def node_update_kernel(h_ref, self_h_ref, tmp_ref, norm_ref, w1_ref, w2_ref, b_ref, out_ref):
    # elementwise normalization in f32 (avoids bf16 cancellation in h - tmp)
    h_norm = (h_ref[...].astype(jnp.float32) - tmp_ref[...].astype(jnp.float32)) * norm_ref[...]
    # fused "concat + Linear": two deep-K MXU matmuls with f32 accumulation
    acc = jnp.dot(self_h_ref[...], w1_ref[...], preferred_element_type=jnp.float32)
    acc = acc + jnp.dot(h_norm.astype(w2_ref.dtype), w2_ref[...],
                        preferred_element_type=jnp.float32)
    acc = acc + b_ref[...]                                     # [1, out_pad] broadcast
    out_ref[...] = jnp.maximum(acc, 0.0).astype(out_ref.dtype)  # ReLU


def node_update(h, self_h, self_h_tmp, norm, subg_norm, weight, bias, *,
                test=False, compute_dtype=jnp.bfloat16, tile_n=None):
    """
    h, self_h, self_h_tmp : [N, F]
    norm, subg_norm       : [N, 1]
    weight                : [out_dim, in_dim] (torch Linear layout), in_dim == 2*F
    bias                  : [out_dim]
    returns 'activation'  : [N, out_dim] in h.dtype
    """
    N, F = h.shape
    out_dim, in_dim = weight.shape
    assert in_dim == 2 * F, "in_dim must equal 2 * feature_dim (concat of self_h and h)"

    orig_dtype = h.dtype
    nrm = norm if test else subg_norm

    # lane-dense padding of feature dims (zero pad -> mathematically a no-op)
    F_pad = _round_up(F, _LANE)
    out_pad = _round_up(out_dim, _LANE)

    in_bytes = jnp.dtype(compute_dtype).itemsize
    out_bytes = jnp.dtype(orig_dtype).itemsize

    vmem_cap = _vmem_capacity_bytes()
    if tile_n is None:
        tile_n = _choose_tile_n(N, F_pad, out_pad, in_bytes, out_bytes, vmem_cap // 2)
    tile_n = max(_SUBLANE, _round_up(int(tile_n), _SUBLANE))
    N_pad = _round_up(N, tile_n)

    def pad2d(x, rows, cols, dtype):
        x = x.astype(dtype)
        pr, pc = rows - x.shape[0], cols - x.shape[1]
        if pr or pc:
            x = jnp.pad(x, ((0, pr), (0, pc)))
        return x

    h_p = pad2d(h, N_pad, F_pad, compute_dtype)
    self_h_p = pad2d(self_h, N_pad, F_pad, compute_dtype)
    tmp_p = pad2d(self_h_tmp, N_pad, F_pad, compute_dtype)
    norm_p = pad2d(nrm, N_pad, 1, jnp.float32)

    # split the Linear weight for the (self_h, h) concat, transpose for x @ W, pad.
    # Note: since F is padded to >=128 the per-dot K is already deep; a single K=2F dot
    # via a VMEM scratch concat is not needed here.
    w1 = pad2d(jnp.transpose(weight[:, :F]), F_pad, out_pad, compute_dtype)
    w2 = pad2d(jnp.transpose(weight[:, F:]), F_pad, out_pad, compute_dtype)
    b2d = pad2d(bias.reshape(1, out_dim), 1, out_pad, jnp.float32)

    grid = (N_pad // tile_n,)

    row_spec = pl.BlockSpec((tile_n, F_pad), lambda i: (i, 0))
    norm_spec = pl.BlockSpec((tile_n, 1), lambda i: (i, 0))
    w_spec = pl.BlockSpec((F_pad, out_pad), lambda i: (0, 0))
    b_spec = pl.BlockSpec((1, out_pad), lambda i: (0, 0))
    out_spec = pl.BlockSpec((tile_n, out_pad), lambda i: (i, 0))

    out_padded = pl.pallas_call(
        node_update_kernel,
        out_shape=jax.ShapeDtypeStruct((N_pad, out_pad), orig_dtype),
        grid_spec=pltpu.PrefetchScalarGridSpec(
            num_scalar_prefetch=0,
            grid=grid,
            in_specs=[row_spec, row_spec, row_spec, norm_spec, w_spec, w_spec, b_spec],
            out_specs=out_spec,
        ),
        compiler_params=pltpu.CompilerParams(
            dimension_semantics=("parallel",),
            vmem_limit_bytes=min(int(vmem_cap * 3 // 4), 96 * 1024 * 1024),
        ),
    )(h_p, self_h_p, tmp_p, norm_p, w1, w2, b2d)

    return out_padded[:N, :out_dim]


def reference(h, self_h, self_h_tmp, norm, subg_norm, weight, bias, *, test=False):
    nrm = norm if test else subg_norm
    hn = (h - self_h_tmp) * nrm
    x = jnp.concatenate((self_h, hn), axis=1)
    return jnp.maximum(x @ weight.T + bias, 0.0)


if __name__ == "__main__":
    key = jax.random.PRNGKey(0)
    N, F = 16, 16
    in_dim, out_dim = 2 * F, 32

    ks = jax.random.split(key, 7)
    h = jax.random.normal(ks[0], (N, F), dtype=jnp.float32)
    self_h = jax.random.normal(ks[1], (N, F), dtype=jnp.float32)
    self_h_tmp = jax.random.normal(ks[2], (N, F), dtype=jnp.float32)
    norm = jax.random.uniform(ks[3], (N, 1), dtype=jnp.float32, minval=0.1, maxval=1.0)
    subg_norm = jax.random.uniform(ks[4], (N, 1), dtype=jnp.float32, minval=0.1, maxval=1.0)

    # deterministic Linear params (mimic torch's uniform(-1/sqrt(in_dim), 1/sqrt(in_dim)))
    bound = 1.0 / jnp.sqrt(jnp.float32(in_dim))
    weight = jax.random.uniform(ks[5], (out_dim, in_dim), dtype=jnp.float32,
                                minval=-bound, maxval=bound)
    bias = jax.random.uniform(ks[6], (out_dim,), dtype=jnp.float32,
                              minval=-bound, maxval=bound)

    ref = reference(h, self_h, self_h_tmp, norm, subg_norm, weight, bias, test=False)
    ref_t = reference(h, self_h, self_h_tmp, norm, subg_norm, weight, bias, test=True)

    # default path: bf16 storage / MXU feed, f32 accumulation
    out = jax.block_until_ready(
        node_update(h, self_h, self_h_tmp, norm, subg_norm, weight, bias, test=False))
    assert out.shape == (N, out_dim)
    assert jnp.allclose(out, ref, atol=3e-2, rtol=3e-2), "bf16 path mismatch vs reference"

    # test=True branch (uses 'norm' instead of 'subg_norm')
    out_t = jax.block_until_ready(
        node_update(h, self_h, self_h_tmp, norm, subg_norm, weight, bias, test=True))
    assert jnp.allclose(out_t, ref_t, atol=3e-2, rtol=3e-2), "bf16 test-branch mismatch"

    # full-precision path: matches the f32 reference tightly (padding is a numerical no-op)
    out_f32 = jax.block_until_ready(
        node_update(h, self_h, self_h_tmp, norm, subg_norm, weight, bias,
                    test=False, compute_dtype=jnp.float32))
    assert jnp.allclose(out_f32, ref, atol=1e-5, rtol=1e-5), "f32 path mismatch vs reference"

    print("KERNEL_OK")
</pallas_src>

<mosaic_0001>
module attributes {stable_mosaic.version = 11 : i64} {
  func.func @node_update_kernel(%arg0: i32, %arg1: memref<128x128xbf16, #tpu.memory_space<vmem>>, %arg2: memref<128x128xbf16, #tpu.memory_space<vmem>>, %arg3: memref<128x128xbf16, #tpu.memory_space<vmem>>, %arg4: memref<128x1xf32, #tpu.memory_space<vmem>>, %arg5: memref<128x128xbf16, #tpu.memory_space<vmem>>, %arg6: memref<128x128xbf16, #tpu.memory_space<vmem>>, %arg7: memref<1x128xf32, #tpu.memory_space<vmem>>, %arg8: memref<128x128xf32, #tpu.memory_space<vmem>>) attributes {dimension_semantics = [#tpu.dimension_semantics<parallel>], iteration_bounds = array<i64: 1>, scalar_prefetch = 0 : i64, scratch_operands = 0 : i64, tpu.core_type = #tpu.core_type<tc>, window_params = [{transform_indices = @transform_0, window_bounds = array<i64: 128, 128>}, {transform_indices = @transform_1, window_bounds = array<i64: 128, 128>}, {transform_indices = @transform_2, window_bounds = array<i64: 128, 128>}, {transform_indices = @transform_3, window_bounds = array<i64: 128, 1>}, {pipeline_mode = #tpu.pipeline_mode<synchronous>, transform_indices = @transform_4, window_bounds = array<i64: 128, 128>}, {pipeline_mode = #tpu.pipeline_mode<synchronous>, transform_indices = @transform_5, window_bounds = array<i64: 128, 128>}, {pipeline_mode = #tpu.pipeline_mode<synchronous>, transform_indices = @transform_6, window_bounds = array<i64: 1, 128>}, {transform_indices = @transform_7, window_bounds = array<i64: 128, 128>}]} {
    %c0 = arith.constant 0 : index
    %c0_0 = arith.constant 0 : index
    %0 = vector.load %arg1[%c0, %c0_0] : memref<128x128xbf16, #tpu.memory_space<vmem>>, vector<128x128xbf16>
    %1 = arith.extf %0 : vector<128x128xbf16> to vector<128x128xf32>
    %c0_1 = arith.constant 0 : index
    %c0_2 = arith.constant 0 : index
    %2 = vector.load %arg3[%c0_1, %c0_2] : memref<128x128xbf16, #tpu.memory_space<vmem>>, vector<128x128xbf16>
    %3 = arith.extf %2 : vector<128x128xbf16> to vector<128x128xf32>
    %4 = arith.subf %1, %3 : vector<128x128xf32>
    %c0_3 = arith.constant 0 : index
    %c0_4 = arith.constant 0 : index
    %5 = vector.load %arg4[%c0_3, %c0_4] : memref<128x1xf32, #tpu.memory_space<vmem>>, vector<128x1xf32>
    %6 = vector.broadcast %5 : vector<128x1xf32> to vector<128x128xf32>
    %7 = arith.mulf %4, %6 : vector<128x128xf32>
    %c0_5 = arith.constant 0 : index
    %c0_6 = arith.constant 0 : index
    %8 = vector.load %arg2[%c0_5, %c0_6] : memref<128x128xbf16, #tpu.memory_space<vmem>>, vector<128x128xbf16>
    %c0_7 = arith.constant 0 : index
    %c0_8 = arith.constant 0 : index
    %9 = vector.load %arg5[%c0_7, %c0_8] : memref<128x128xbf16, #tpu.memory_space<vmem>>, vector<128x128xbf16>
    %cst = arith.constant dense<0.000000e+00> : vector<128x128xf32>
    %10 = tpu.matmul %8, %9, %cst {dimension_numbers = #tpu.dot_dimension_numbers<[1], [0], [0], [1], [0, 0, 1, 1], [], []>} : vector<128x128xbf16>, vector<128x128xbf16>, vector<128x128xf32> -> vector<128x128xf32>
    %11 = arith.truncf %7 : vector<128x128xf32> to vector<128x128xbf16>
    %c0_9 = arith.constant 0 : index
    %c0_10 = arith.constant 0 : index
    %12 = vector.load %arg6[%c0_9, %c0_10] : memref<128x128xbf16, #tpu.memory_space<vmem>>, vector<128x128xbf16>
    %cst_11 = arith.constant dense<0.000000e+00> : vector<128x128xf32>
    %13 = tpu.matmul %11, %12, %cst_11 {dimension_numbers = #tpu.dot_dimension_numbers<[1], [0], [0], [1], [0, 0, 1, 1], [], []>} : vector<128x128xbf16>, vector<128x128xbf16>, vector<128x128xf32> -> vector<128x128xf32>
    %14 = arith.addf %10, %13 : vector<128x128xf32>
    %c0_12 = arith.constant 0 : index
    %c0_13 = arith.constant 0 : index
    %15 = vector.load %arg7[%c0_12, %c0_13] : memref<1x128xf32, #tpu.memory_space<vmem>>, vector<1x128xf32>
    %16 = vector.broadcast %15 : vector<1x128xf32> to vector<128x128xf32>
    %17 = arith.addf %14, %16 : vector<128x128xf32>
    %cst_14 = arith.constant 0.000000e+00 : f32
    %18 = vector.broadcast %cst_14 : f32 to vector<128x128xf32>
    %19 = arith.maximumf %17, %18 : vector<128x128xf32>
    %c0_15 = arith.constant 0 : index
    %c0_16 = arith.constant 0 : index
    %20 = vector.load %arg8[%c0_15, %c0_16] : memref<128x128xf32, #tpu.memory_space<vmem>>, vector<128x128xf32>
    tpu.vector_store %arg8[%c0_15, %c0_16], %19 {strides = array<i32>} : memref<128x128xf32, #tpu.memory_space<vmem>>, vector<128x128xf32>,
    return
  }
  func.func @transform_0(%arg0: i32) -> (i32, i32) {
    %c0_i32 = arith.constant 0 : i32
    %c0_i32_0 = arith.constant 0 : i32
    return %arg0, %c0_i32 : i32, i32
  }
  func.func @transform_1(%arg0: i32) -> (i32, i32) {
    %c0_i32 = arith.constant 0 : i32
    %c0_i32_0 = arith.constant 0 : i32
    return %arg0, %c0_i32 : i32, i32
  }
  func.func @transform_2(%arg0: i32) -> (i32, i32) {
    %c0_i32 = arith.constant 0 : i32
    %c0_i32_0 = arith.constant 0 : i32
    return %arg0, %c0_i32 : i32, i32
  }
  func.func @transform_3(%arg0: i32) -> (i32, i32) {
    %c0_i32 = arith.constant 0 : i32
    %c0_i32_0 = arith.constant 0 : i32
    return %arg0, %c0_i32 : i32, i32
  }
  func.func @transform_4(%arg0: i32) -> (i32, i32) {
    %c0_i32 = arith.constant 0 : i32
    %c0_i32_0 = arith.constant 0 : i32
    %c0_i32_1 = arith.constant 0 : i32
    return %c0_i32, %c0_i32_0 : i32, i32
  }
  func.func @transform_5(%arg0: i32) -> (i32, i32) {
    %c0_i32 = arith.constant 0 : i32
    %c0_i32_0 = arith.constant 0 : i32
    %c0_i32_1 = arith.constant 0 : i32
    return %c0_i32, %c0_i32_0 : i32, i32
  }
  func.func @transform_6(%arg0: i32) -> (i32, i32) {
    %c0_i32 = arith.constant 0 : i32
    %c0_i32_0 = arith.constant 0 : i32
    %c0_i32_1 = arith.constant 0 : i32
    return %c0_i32, %c0_i32_0 : i32, i32
  }
  func.func @transform_7(%arg0: i32) -> (i32, i32) {
    %c0_i32 = arith.constant 0 : i32
    %c0_i32_0 = arith.constant 0 : i32
    return %arg0, %c0_i32 : i32, i32
  }
}

</mosaic_0001>

<llo_original>
// kernel: tpu_custom_call.1
$region0: #{tpu_custom_call.1}
  #allocation0 [shape = 'u32[]', space=smem, size = 0x4, offset = 0x4, fixed_abs, tag = 'smem constant byte address 0x4 - core index']
  #allocation1 [shape = 'u32[144,128]{1,0:T(1,128)}', space=vmem, size = 0x12000, scoped, tag = 'internal scratch']
  %s0 = inlined_call_operand.vmem [shape: bf16[128,128], index: 0, kind: input, shape index: {}]
  %s1 = inlined_call_operand.vmem [shape: bf16[128,128], index: 1, kind: input, shape index: {}]
  %s2 = inlined_call_operand.hbm [shape: bf16[128,128], index: 2, kind: input, shape index: {}]
  %s3 = inlined_call_operand.vmem [shape: f32[128,1], index: 3, kind: input, shape index: {}]
  %s4 = inlined_call_operand.hbm [shape: bf16[128,128], index: 4, kind: input, shape index: {}]
  %s5 = inlined_call_operand.hbm [shape: bf16[128,128], index: 5, kind: input, shape index: {}]
  %s6 = inlined_call_operand.vmem [shape: f32[1,128], index: 6, kind: input, shape index: {}]
  %s7 = inlined_call_operand.hbm [shape: f32[128,128], index: 7, kind: output, shape index: {}]
  %s8 = sld [smem:[#allocation0]]
  $region50: #{tpu_custom_call.1} parent=0
    _
  %s10 = ssub.s32 1, %s8
  %s11 = scalar_select 0, %s10, %s8
  $region1: #{tpu_custom_call.1} parent=0
    #allocation2 [shape = 'u8[32768]{0}', space=vmem, size = 0x8000, scoped, tag = 'input window, operand 2, single buffered']
    #allocation3 [shape = 's32[1]{0}', space=sflag, size = 0x4, scoped, tag = 'scoped memory for tpu_custom_call.1']
    #allocation4 [shape = 's32[1]{0}', space=sflag, size = 0x4, scoped, tag = 'scoped memory for tpu_custom_call.1']
    #allocation5 [shape = 'u8[32768]{0}', space=vmem, size = 0x8000, scoped, tag = 'input window, operand 4, single buffered']
    #allocation6 [shape = 's32[1]{0}', space=sflag, size = 0x4, scoped, tag = 'scoped memory for tpu_custom_call.1']
    #allocation7 [shape = 'u8[32768]{0}', space=vmem, size = 0x8000, scoped, tag = 'input window, operand 5, single buffered']
    #allocation8 [shape = 'u8[65536]{0}', space=vmem, size = 0x10000, scoped, tag = 'output window, operand 0, single buffered']
    %12 = vsyncpa [#allocation3], 0
    %13 = vsyncpa [#allocation6], 0
    %14 = vsyncpa [#allocation4], 0
    // Predicated region
    $region2: #{tpu_custom_call.1} parent=1 // pred_check
      _
    $region3: #{tpu_custom_call.1} parent=1 // pred_check_branch
      %16 = sbr.rel (0) target = $region5
    $region4: #{tpu_custom_call.1} parent=1 // pred_region
      _
    $region5: #{tpu_custom_call.1} parent=1 // pred_fallthru
      _
    // Predicated region
    $region6: #{tpu_custom_call.1} parent=1 // pred_check
      _
    $region7: #{tpu_custom_call.1} parent=1 // pred_check_branch
      %18 = sbr.rel (0) target = $region9
    $region8: #{tpu_custom_call.1} parent=1 // pred_region
      _
    $region9: #{tpu_custom_call.1} parent=1 // pred_fallthru
      _
    // Predicated region
    $region10: #{tpu_custom_call.1} parent=1 // pred_check
      _
    $region11: #{tpu_custom_call.1} parent=1 // pred_check_branch
      %20 = sbr.rel (0) target = $region13
    $region12: #{tpu_custom_call.1} parent=1 // pred_region
      %s22 = ssub.s32 1024, 1024
      %23 = vsyncadd [#allocation3], %s22
      %s24 = sshll.u32 [#allocation2], 4
      %s25 = int_to_ptr.vmem [resolvable:$true] %s24
      %30 = dma.hbm_to_vmem [thread:$0]  %s2, 1024, %s25, [#allocation3], 64, 64, 4
    $region13: #{tpu_custom_call.1} parent=1 // pred_fallthru
      _
    // Predicated region
    $region14: #{tpu_custom_call.1} parent=1 // pred_check
      _
    $region15: #{tpu_custom_call.1} parent=1 // pred_check_branch
      %32 = sbr.rel (0) target = $region17
    $region16: #{tpu_custom_call.1} parent=1 // pred_region
      _
    $region17: #{tpu_custom_call.1} parent=1 // pred_fallthru
      _
    // Predicated region
    $region18: #{tpu_custom_call.1} parent=1 // pred_check
      _
    $region19: #{tpu_custom_call.1} parent=1 // pred_check_branch
      %34 = sbr.rel (0) target = $region21
    $region20: #{tpu_custom_call.1} parent=1 // pred_region
      %s36 = ssub.s32 1024, 1024
      %37 = vsyncadd [#allocation6], %s36
      %s38 = sshll.u32 [#allocation5], 4
      %s39 = int_to_ptr.vmem [resolvable:$true] %s38
      %44 = dma.hbm_to_vmem [thread:$0]  %s4, 1024, %s39, [#allocation6], 64, 64, 4
    $region21: #{tpu_custom_call.1} parent=1 // pred_fallthru
      _
    // Predicated region
    $region22: #{tpu_custom_call.1} parent=1 // pred_check
      _
    $region23: #{tpu_custom_call.1} parent=1 // pred_check_branch
      %46 = sbr.rel (0) target = $region25
    $region24: #{tpu_custom_call.1} parent=1 // pred_region
      %s48 = ssub.s32 1024, 1024
      %49 = vsyncadd [#allocation6], %s48
      %s50 = sshll.u32 [#allocation7], 4
      %s51 = int_to_ptr.vmem [resolvable:$true] %s50
      %56 = dma.hbm_to_vmem [thread:$0]  %s5, 1024, %s51, [#allocation6], 64, 64, 4
    $region25: #{tpu_custom_call.1} parent=1 // pred_fallthru
      _
    // Predicated region
    $region26: #{tpu_custom_call.1} parent=1 // pred_check
      _
    $region27: #{tpu_custom_call.1} parent=1 // pred_check_branch
      %58 = sbr.rel (0) target = $region29
    $region28: #{tpu_custom_call.1} parent=1 // pred_region
      _
    $region29: #{tpu_custom_call.1} parent=1 // pred_fallthru
      _
    // Predicated region
    $region30: #{tpu_custom_call.1} parent=1 // pred_check
      _
    $region31: #{tpu_custom_call.1} parent=1 // pred_check_branch
      %60 = sbr.rel (0) target = $region33
    $region32: #{tpu_custom_call.1} parent=1 // pred_region
      %61 = dma.done [#allocation3], 1024
    $region33: #{tpu_custom_call.1} parent=1 // pred_fallthru
      _
    // Predicated region
    $region34: #{tpu_custom_call.1} parent=1 // pred_check
      _
    $region35: #{tpu_custom_call.1} parent=1 // pred_check_branch
      %63 = sbr.rel (0) target = $region37
    $region36: #{tpu_custom_call.1} parent=1 // pred_region
      %64 = dma.done [#allocation6], 1024
    $region37: #{tpu_custom_call.1} parent=1 // pred_fallthru
      _
    // Predicated region
    $region38: #{tpu_custom_call.1} parent=1 // pred_check
      _
    $region39: #{tpu_custom_call.1} parent=1 // pred_check_branch
      %66 = sbr.rel (0) target = $region41
    $region40: #{tpu_custom_call.1} parent=1 // pred_region
      %67 = dma.done [#allocation6], 1024
    $region41: #{tpu_custom_call.1} parent=1 // pred_fallthru
      _
    %v69 = vld [vmem:[%s0] sm:$0xf]
    %v70 = vld [vmem:[%s0 + $0x4] sm:$0xf]
    %v71 = vld [vmem:[%s0 + $0x8] sm:$0xf]
    %v72 = vld [vmem:[%s0 + $0xc] sm:$0xf]
    %v73 = vld [vmem:[%s0 + $0x10] sm:$0xf]
    %v74 = vld [vmem:[%s0 + $0x14] sm:$0xf]
    %v75 = vld [vmem:[%s0 + $0x18] sm:$0xf]
    %v76 = vld [vmem:[%s0 + $0x1c] sm:$0xf]
    %v77 = vld [vmem:[%s0 + $0x20] sm:$0xf]
    %v78 = vld [vmem:[%s0 + $0x24] sm:$0xf]
    %v79 = vld [vmem:[%s0 + $0x28] sm:$0xf]
    %v80 = vld [vmem:[%s0 + $0x2c] sm:$0xf]
    %v81 = vld [vmem:[%s0 + $0x30] sm:$0xf]
    %v82 = vld [vmem:[%s0 + $0x34] sm:$0xf]
    %v83 = vld [vmem:[%s0 + $0x38] sm:$0xf]
    %v84 = vld [vmem:[%s0 + $0x3c] sm:$0xf]
    %v85 = vunpack.c.l.bf16 %v69
    %v86 = vunpack.c.l.bf16 %v70
    %v87 = vunpack.c.l.bf16 %v71
    %v88 = vunpack.c.l.bf16 %v72
    %v89 = vunpack.c.l.bf16 %v73
    %v90 = vunpack.c.l.bf16 %v74
    %v91 = vunpack.c.l.bf16 %v75
    %v92 = vunpack.c.l.bf16 %v76
    %v93 = vunpack.c.l.bf16 %v77
    %v94 = vunpack.c.l.bf16 %v78
    %v95 = vunpack.c.l.bf16 %v79
    %v96 = vunpack.c.l.bf16 %v80
    %v97 = vunpack.c.l.bf16 %v81
    %v98 = vunpack.c.l.bf16 %v82
    %v99 = vunpack.c.l.bf16 %v83
    %v100 = vunpack.c.l.bf16 %v84
    %v101 = vld [vmem:[#allocation2] sm:$0xf]
    %v102 = vld [vmem:[#allocation2 + $0x4] sm:$0xf]
    %v103 = vld [vmem:[#allocation2 + $0x8] sm:$0xf]
    %v104 = vld [vmem:[#allocation2 + $0xc] sm:$0xf]
    %v105 = vld [vmem:[#allocation2 + $0x10] sm:$0xf]
    %v106 = vld [vmem:[#allocation2 + $0x14] sm:$0xf]
    %v107 = vld [vmem:[#allocation2 + $0x18] sm:$0xf]
    %v108 = vld [vmem:[#allocation2 + $0x1c] sm:$0xf]
    %v109 = vld [vmem:[#allocation2 + $0x20] sm:$0xf]
    %v110 = vld [vmem:[#allocation2 + $0x24] sm:$0xf]
    %v111 = vld [vmem:[#allocation2 + $0x28] sm:$0xf]
    %v112 = vld [vmem:[#allocation2 + $0x2c] sm:$0xf]
    %v113 = vld [vmem:[#allocation2 + $0x30] sm:$0xf]
    %v114 = vld [vmem:[#allocation2 + $0x34] sm:$0xf]
    %v115 = vld [vmem:[#allocation2 + $0x38] sm:$0xf]
    %v116 = vld [vmem:[#allocation2 + $0x3c] sm:$0xf]
    %v117 = vunpack.c.l.bf16 %v101
    %v118 = vunpack.c.l.bf16 %v102
    %v119 = vunpack.c.l.bf16 %v103
    %v120 = vunpack.c.l.bf16 %v104
    %v121 = vunpack.c.l.bf16 %v105
    %v122 = vunpack.c.l.bf16 %v106
    %v123 = vunpack.c.l.bf16 %v107
    %v124 = vunpack.c.l.bf16 %v108
    %v125 = vunpack.c.l.bf16 %v109
    %v126 = vunpack.c.l.bf16 %v110
    %v127 = vunpack.c.l.bf16 %v111
    %v128 = vunpack.c.l.bf16 %v112
    %v129 = vunpack.c.l.bf16 %v113
    %v130 = vunpack.c.l.bf16 %v114
    %v131 = vunpack.c.l.bf16 %v115
    %v132 = vunpack.c.l.bf16 %v116
    %v133 = vsub.f32 %v85, %v117
    %v134 = vsub.f32 %v86, %v118
    %v135 = vsub.f32 %v87, %v119
    %v136 = vsub.f32 %v88, %v120
    %v137 = vsub.f32 %v89, %v121
    %v138 = vsub.f32 %v90, %v122
    %v139 = vsub.f32 %v91, %v123
    %v140 = vsub.f32 %v92, %v124
    %v141 = vsub.f32 %v93, %v125
    %v142 = vsub.f32 %v94, %v126
    %v143 = vsub.f32 %v95, %v127
    %v144 = vsub.f32 %v96, %v128
    %v145 = vsub.f32 %v97, %v129
    %v146 = vsub.f32 %v98, %v130
    %v147 = vsub.f32 %v99, %v131
    %v148 = vsub.f32 %v100, %v132
    %v149 = vld [vmem:[%s3] sm:$0xff]
    %v150 = vld [vmem:[%s3 + $0x8] sm:$0xff]
    %v151 = vld [vmem:[%s3 + $0x10] sm:$0xff]
    %v152 = vld [vmem:[%s3 + $0x18] sm:$0xff]
    %v153 = vld [vmem:[%s3 + $0x20] sm:$0xff]
    %v154 = vld [vmem:[%s3 + $0x28] sm:$0xff]
    %v155 = vld [vmem:[%s3 + $0x30] sm:$0xff]
    %v156 = vld [vmem:[%s3 + $0x38] sm:$0xff]
    %v157 = vld [vmem:[%s3 + $0x40] sm:$0xff]
    %v158 = vld [vmem:[%s3 + $0x48] sm:$0xff]
    %v159 = vld [vmem:[%s3 + $0x50] sm:$0xff]
    %v160 = vld [vmem:[%s3 + $0x58] sm:$0xff]
    %v161 = vld [vmem:[%s3 + $0x60] sm:$0xff]
    %v162 = vld [vmem:[%s3 + $0x68] sm:$0xff]
    %v163 = vld [vmem:[%s3 + $0x70] sm:$0xff]
    %v164 = vld [vmem:[%s3 + $0x78] sm:$0xff]
    %166 = vset.pattern.permute.xlu0 0
    %167 = vperm.xlu0 %166, %v149
    %v168 = vpop.permute.xlu0 %167
    %171 = vset.pattern.permute.xlu0 0
    %172 = vperm.xlu0 %171, %v150
    %v173 = vpop.permute.xlu0 %172
    %176 = vset.pattern.permute.xlu0 0
    %177 = vperm.xlu0 %176, %v151
    %v178 = vpop.permute.xlu0 %177
    %181 = vset.pattern.permute.xlu0 0
    %182 = vperm.xlu0 %181, %v152
    %v183 = vpop.permute.xlu0 %182
    %186 = vset.pattern.permute.xlu0 0
    %187 = vperm.xlu0 %186, %v153
    %v188 = vpop.permute.xlu0 %187
    %191 = vset.pattern.permute.xlu0 0
    %192 = vperm.xlu0 %191, %v154
    %v193 = vpop.permute.xlu0 %192
    %196 = vset.pattern.permute.xlu0 0
    %197 = vperm.xlu0 %196, %v155
    %v198 = vpop.permute.xlu0 %197
    %201 = vset.pattern.permute.xlu0 0
    %202 = vperm.xlu0 %201, %v156
    %v203 = vpop.permute.xlu0 %202
    %206 = vset.pattern.permute.xlu0 0
    %207 = vperm.xlu0 %206, %v157
    %v208 = vpop.permute.xlu0 %207
    %211 = vset.pattern.permute.xlu0 0
    %212 = vperm.xlu0 %211, %v158
    %v213 = vpop.permute.xlu0 %212
    %216 = vset.pattern.permute.xlu0 0
    %217 = vperm.xlu0 %216, %v159
    %v218 = vpop.permute.xlu0 %217
    %221 = vset.pattern.permute.xlu0 0
    %222 = vperm.xlu0 %221, %v160
    %v223 = vpop.permute.xlu0 %222
    %226 = vset.pattern.permute.xlu0 0
    %227 = vperm.xlu0 %226, %v161
    %v228 = vpop.permute.xlu0 %227
    %231 = vset.pattern.permute.xlu0 0
    %232 = vperm.xlu0 %231, %v162
    %v233 = vpop.permute.xlu0 %232
    %236 = vset.pattern.permute.xlu0 0
    %237 = vperm.xlu0 %236, %v163
    %v238 = vpop.permute.xlu0 %237
    %241 = vset.pattern.permute.xlu0 0
    %242 = vperm.xlu0 %241, %v164
    %v243 = vpop.permute.xlu0 %242
    %v245 = vmul.f32 %v133, %v168
    %v246 = vmul.f32 %v134, %v173
    %v247 = vmul.f32 %v135, %v178
    %v248 = vmul.f32 %v136, %v183
    %v249 = vmul.f32 %v137, %v188
    %v250 = vmul.f32 %v138, %v193
    %v251 = vmul.f32 %v139, %v198
    %v252 = vmul.f32 %v140, %v203
    %v253 = vmul.f32 %v141, %v208
    %v254 = vmul.f32 %v142, %v213
    %v255 = vmul.f32 %v143, %v218
    %v256 = vmul.f32 %v144, %v223
    %v257 = vmul.f32 %v145, %v228
    %v258 = vmul.f32 %v146, %v233
    %v259 = vmul.f32 %v147, %v238
    %v260 = vmul.f32 %v148, %v243
    %v261 = vld [vmem:[%s1] sm:$0xf]
    %v262 = vld [vmem:[%s1 + $0x4] sm:$0xf]
    %v263 = vld [vmem:[%s1 + $0x8] sm:$0xf]
    %v264 = vld [vmem:[%s1 + $0xc] sm:$0xf]
    %v265 = vld [vmem:[%s1 + $0x10] sm:$0xf]
    %v266 = vld [vmem:[%s1 + $0x14] sm:$0xf]
    %v267 = vld [vmem:[%s1 + $0x18] sm:$0xf]
    %v268 = vld [vmem:[%s1 + $0x1c] sm:$0xf]
    %v269 = vld [vmem:[%s1 + $0x20] sm:$0xf]
    %v270 = vld [vmem:[%s1 + $0x24] sm:$0xf]
    %v271 = vld [vmem:[%s1 + $0x28] sm:$0xf]
    %v272 = vld [vmem:[%s1 + $0x2c] sm:$0xf]
    %v273 = vld [vmem:[%s1 + $0x30] sm:$0xf]
    %v274 = vld [vmem:[%s1 + $0x34] sm:$0xf]
    %v275 = vld [vmem:[%s1 + $0x38] sm:$0xf]
    %v276 = vld [vmem:[%s1 + $0x3c] sm:$0xf]
    %v277 = vld [vmem:[#allocation5] sm:$0xf]
    %v278 = vld [vmem:[#allocation5 + $0x4] sm:$0xf]
    %v279 = vld [vmem:[#allocation5 + $0x8] sm:$0xf]
    %v280 = vld [vmem:[#allocation5 + $0xc] sm:$0xf]
    %v281 = vld [vmem:[#allocation5 + $0x10] sm:$0xf]
    %v282 = vld [vmem:[#allocation5 + $0x14] sm:$0xf]
    %v283 = vld [vmem:[#allocation5 + $0x18] sm:$0xf]
    %v284 = vld [vmem:[#allocation5 + $0x1c] sm:$0xf]
    %v285 = vld [vmem:[#allocation5 + $0x20] sm:$0xf]
    %v286 = vld [vmem:[#allocation5 + $0x24] sm:$0xf]
    %v287 = vld [vmem:[#allocation5 + $0x28] sm:$0xf]
    %v288 = vld [vmem:[#allocation5 + $0x2c] sm:$0xf]
    %v289 = vld [vmem:[#allocation5 + $0x30] sm:$0xf]
    %v290 = vld [vmem:[#allocation5 + $0x34] sm:$0xf]
    %v291 = vld [vmem:[#allocation5 + $0x38] sm:$0xf]
    %v292 = vld [vmem:[#allocation5 + $0x3c] sm:$0xf]
    %v293 = vpack.c.bf16 %v246, %v245
    %v294 = vpack.c.bf16 %v248, %v247
    %v295 = vpack.c.bf16 %v250, %v249
    %v296 = vpack.c.bf16 %v252, %v251
    %v297 = vpack.c.bf16 %v254, %v253
    %v298 = vpack.c.bf16 %v256, %v255
    %v299 = vpack.c.bf16 %v258, %v257
    %v300 = vpack.c.bf16 %v260, %v259
    %v301 = vld [vmem:[#allocation7] sm:$0xf]
    %v302 = vld [vmem:[#allocation7 + $0x4] sm:$0xf]
    %v303 = vld [vmem:[#allocation7 + $0x8] sm:$0xf]
    %v304 = vld [vmem:[#allocation7 + $0xc] sm:$0xf]
    %v305 = vld [vmem:[#allocation7 + $0x10] sm:$0xf]
    %v306 = vld [vmem:[#allocation7 + $0x14] sm:$0xf]
    %v307 = vld [vmem:[#allocation7 + $0x18] sm:$0xf]
    %v308 = vld [vmem:[#allocation7 + $0x1c] sm:$0xf]
    %v309 = vld [vmem:[#allocation7 + $0x20] sm:$0xf]
    %v310 = vld [vmem:[#allocation7 + $0x24] sm:$0xf]
    %v311 = vld [vmem:[#allocation7 + $0x28] sm:$0xf]
    %v312 = vld [vmem:[#allocation7 + $0x2c] sm:$0xf]
    %v313 = vld [vmem:[#allocation7 + $0x30] sm:$0xf]
    %v314 = vld [vmem:[#allocation7 + $0x34] sm:$0xf]
    %v315 = vld [vmem:[#allocation7 + $0x38] sm:$0xf]
    %v316 = vld [vmem:[#allocation7 + $0x3c] sm:$0xf]
    %v333 = vunpack.c.l.b16 %v301
    %v334 = vunpack.c.l.b16 %v302
    %v335 = vunpack.c.l.b16 %v303
    %v336 = vunpack.c.l.b16 %v304
    %v337 = vunpack.c.l.b16 %v305
    %v338 = vunpack.c.l.b16 %v306
    %v339 = vunpack.c.l.b16 %v307
    %v340 = vunpack.c.l.b16 %v308
    %v341 = vunpack.c.l.b16 %v309
    %v342 = vunpack.c.l.b16 %v310
    %v343 = vunpack.c.l.b16 %v311
    %v344 = vunpack.c.l.b16 %v312
    %v345 = vunpack.c.l.b16 %v313
    %v346 = vunpack.c.l.b16 %v314
    %v347 = vunpack.c.l.b16 %v315
    %v348 = vunpack.c.l.b16 %v316
    %v349 = vpack.c.b16 %v334, %v333
    %v350 = vpack.c.b16 %v336, %v335
    %v351 = vpack.c.b16 %v338, %v337
    %v352 = vpack.c.b16 %v340, %v339
    %v353 = vpack.c.b16 %v342, %v341
    %v354 = vpack.c.b16 %v344, %v343
    %v355 = vpack.c.b16 %v346, %v345
    %v356 = vpack.c.b16 %v348, %v347
    %365 = vmatprep.subr.bf16.mxu0 0
    %366 = vmatpush1.bf16.msra.mxu0 %v349
    %367 = vmatprep.subr.bf16.mxu0 0
    %368 = vmatpush1.bf16.msra.mxu0 %v350
    %369 = vmatprep.subr.bf16.mxu0 0
    %370 = vmatpush1.bf16.msra.mxu0 %v351
    %371 = vmatprep.subr.bf16.mxu0 0
    %372 = vmatpush1.bf16.msra.mxu0 %v352
    %373 = vmatprep.subr.bf16.mxu0 0
    %374 = vmatpush1.bf16.msra.mxu0 %v353
    %375 = vmatprep.subr.bf16.mxu0 0
    %376 = vmatpush1.bf16.msra.mxu0 %v354
    %377 = vmatprep.subr.bf16.mxu0 0
    %378 = vmatpush1.bf16.msra.mxu0 %v355
    %379 = vmatprep.subr.bf16.mxu0 0
    %380 = vmatpush1.bf16.msra.mxu0 %v356
    %381 = vmatprep.subr.bf16.mxu0 0
    %382 = vmatpush1.bf16.msra.mxu0 0
    %383 = vmatprep.subr.bf16.mxu0 0
    %384 = vmatpush1.bf16.msra.mxu0 0
    %385 = vmatprep.subr.bf16.mxu0 0
    %386 = vmatpush1.bf16.msra.mxu0 0
    %387 = vmatprep.subr.bf16.mxu0 0
    %388 = vmatpush1.bf16.msra.mxu0 0
    %389 = vmatprep.subr.bf16.mxu0 0
    %390 = vmatpush1.bf16.msra.mxu0 0
    %391 = vmatprep.subr.bf16.mxu0 0
    %392 = vmatpush1.bf16.msra.mxu0 0
    %393 = vmatprep.subr.bf16.mxu0 0
    %394 = vmatpush1.bf16.msra.mxu0 0
    %395 = vmatprep.subr.bf16.mxu0 0
    %396 = vmatpush1.bf16.msra.mxu0 0
    %397 = vmatprep.mubr.bf16.mxu0 0
    %398 = vmatmul.mubr.bf16.gmra.mrb[0].mxu0 %v293
    %v399 = vpop.f32.mrb[0].mxu0
    %v400 = vadd.f32 0.0, %v399
    %v401 = vpop.f32.mrb[0].mxu0
    %v402 = vpop.f32.mrb[0].mxu0
    %v403 = vadd.f32 0.0, %v402
    %v404 = vpop.f32.mrb[0].mxu0
    %405 = vmatprep.mubr.bf16.mxu0 0
    %406 = vmatmul.mubr.bf16.gmra.mrb[0].mxu0 %v294
    %v407 = vpop.f32.mrb[0].mxu0
    %v408 = vadd.f32 0.0, %v407
    %v409 = vpop.f32.mrb[0].mxu0
    %v410 = vpop.f32.mrb[0].mxu0
    %v411 = vadd.f32 0.0, %v410
    %v412 = vpop.f32.mrb[0].mxu0
    %413 = vmatprep.mubr.bf16.mxu0 0
    %414 = vmatmul.mubr.bf16.gmra.mrb[0].mxu0 %v295
    %v415 = vpop.f32.mrb[0].mxu0
    %v416 = vadd.f32 0.0, %v415
    %v417 = vpop.f32.mrb[0].mxu0
    %v418 = vpop.f32.mrb[0].mxu0
    %v419 = vadd.f32 0.0, %v418
    %v420 = vpop.f32.mrb[0].mxu0
    %421 = vmatprep.mubr.bf16.mxu0 0
    %422 = vmatmul.mubr.bf16.gmra.mrb[0].mxu0 %v296
    %v423 = vpop.f32.mrb[0].mxu0
    %v424 = vadd.f32 0.0, %v423
    %v425 = vpop.f32.mrb[0].mxu0
    %v426 = vpop.f32.mrb[0].mxu0
    %v427 = vadd.f32 0.0, %v426
    %v428 = vpop.f32.mrb[0].mxu0
    %429 = vmatprep.mubr.bf16.mxu0 0
    %430 = vmatmul.mubr.bf16.gmra.mrb[0].mxu0 %v297
    %v431 = vpop.f32.mrb[0].mxu0
    %v432 = vadd.f32 0.0, %v431
    %v433 = vpop.f32.mrb[0].mxu0
    %v434 = vpop.f32.mrb[0].mxu0
    %v435 = vadd.f32 0.0, %v434
    %v436 = vpop.f32.mrb[0].mxu0
    %437 = vmatprep.mubr.bf16.mxu0 0
    %438 = vmatmul.mubr.bf16.gmra.mrb[0].mxu0 %v298
    %v439 = vpop.f32.mrb[0].mxu0
    %v440 = vadd.f32 0.0, %v439
    %v441 = vpop.f32.mrb[0].mxu0
    %v442 = vpop.f32.mrb[0].mxu0
    %v443 = vadd.f32 0.0, %v442
    %v444 = vpop.f32.mrb[0].mxu0
    %445 = vmatprep.mubr.bf16.mxu0 0
    %446 = vmatmul.mubr.bf16.gmra.mrb[0].mxu0 %v299
    %v447 = vpop.f32.mrb[0].mxu0
    %v448 = vadd.f32 0.0, %v447
    %v449 = vpop.f32.mrb[0].mxu0
    %v450 = vpop.f32.mrb[0].mxu0
    %v451 = vadd.f32 0.0, %v450
    %v452 = vpop.f32.mrb[0].mxu0
    %453 = vmatprep.mubr.bf16.mxu0 0
    %454 = vmatmul.mubr.bf16.gmra.mrb[0].mxu0 %v300
    %v455 = vpop.f32.mrb[0].mxu0
    %v456 = vadd.f32 0.0, %v455
    %v457 = vpop.f32.mrb[0].mxu0
    %v458 = vpop.f32.mrb[0].mxu0
    %v459 = vadd.f32 0.0, %v458
    %v460 = vpop.f32.mrb[0].mxu0
    %461 = vdwg.mxu0
    %v478 = vunpack.c.l.b16 %v261
    %v479 = vunpack.c.l.b16 %v262
    %v480 = vunpack.c.l.b16 %v263
    %v481 = vunpack.c.l.b16 %v264
    %v482 = vunpack.c.l.b16 %v265
    %v483 = vunpack.c.l.b16 %v266
    %v484 = vunpack.c.l.b16 %v267
    %v485 = vunpack.c.l.b16 %v268
    %v486 = vunpack.c.l.b16 %v269
    %v487 = vunpack.c.l.b16 %v270
    %v488 = vunpack.c.l.b16 %v271
    %v489 = vunpack.c.l.b16 %v272
    %v490 = vunpack.c.l.b16 %v273
    %v491 = vunpack.c.l.b16 %v274
    %v492 = vunpack.c.l.b16 %v275
    %v493 = vunpack.c.l.b16 %v276
    %v494 = vpack.c.b16 %v479, %v478
    %v495 = vpack.c.b16 %v481, %v480
    %v496 = vpack.c.b16 %v483, %v482
    %v497 = vpack.c.b16 %v485, %v484
    %v498 = vpack.c.b16 %v487, %v486
    %v499 = vpack.c.b16 %v489, %v488
    %v500 = vpack.c.b16 %v491, %v490
    %v501 = vpack.c.b16 %v493, %v492
    %v526 = vunpack.c.l.b16 %v277
    %v527 = vunpack.c.l.b16 %v278
    %v528 = vunpack.c.l.b16 %v279
    %v529 = vunpack.c.l.b16 %v280
    %v530 = vunpack.c.l.b16 %v281
    %v531 = vunpack.c.l.b16 %v282
    %v532 = vunpack.c.l.b16 %v283
    %v533 = vunpack.c.l.b16 %v284
    %v534 = vunpack.c.l.b16 %v285
    %v535 = vunpack.c.l.b16 %v286
    %v536 = vunpack.c.l.b16 %v287
    %v537 = vunpack.c.l.b16 %v288
    %v538 = vunpack.c.l.b16 %v289
    %v539 = vunpack.c.l.b16 %v290
    %v540 = vunpack.c.l.b16 %v291
    %v541 = vunpack.c.l.b16 %v292
    %v542 = vpack.c.b16 %v527, %v526
    %v543 = vpack.c.b16 %v529, %v528
    %v544 = vpack.c.b16 %v531, %v530
    %v545 = vpack.c.b16 %v533, %v532
    %v546 = vpack.c.b16 %v535, %v534
    %v547 = vpack.c.b16 %v537, %v536
    %v548 = vpack.c.b16 %v539, %v538
    %v549 = vpack.c.b16 %v541, %v540
    %558 = vmatprep.subr.bf16.mxu0 0
    %559 = vmatpush1.bf16.msra.mxu0 %v542
    %560 = vmatprep.subr.bf16.mxu0 0
    %561 = vmatpush1.bf16.msra.mxu0 %v543
    %562 = vmatprep.subr.bf16.mxu0 0
    %563 = vmatpush1.bf16.msra.mxu0 %v544
    %564 = vmatprep.subr.bf16.mxu0 0
    %565 = vmatpush1.bf16.msra.mxu0 %v545
    %566 = vmatprep.subr.bf16.mxu0 0
    %567 = vmatpush1.bf16.msra.mxu0 %v546
    %568 = vmatprep.subr.bf16.mxu0 0
    %569 = vmatpush1.bf16.msra.mxu0 %v547
    %570 = vmatprep.subr.bf16.mxu0 0
    %571 = vmatpush1.bf16.msra.mxu0 %v548
    %572 = vmatprep.subr.bf16.mxu0 0
    %573 = vmatpush1.bf16.msra.mxu0 %v549
    %574 = vmatprep.subr.bf16.mxu0 0
    %575 = vmatpush1.bf16.msra.mxu0 0
    %576 = vmatprep.subr.bf16.mxu0 0
    %577 = vmatpush1.bf16.msra.mxu0 0
    %578 = vmatprep.subr.bf16.mxu0 0
    %579 = vmatpush1.bf16.msra.mxu0 0
    %580 = vmatprep.subr.bf16.mxu0 0
    %581 = vmatpush1.bf16.msra.mxu0 0
    %582 = vmatprep.subr.bf16.mxu0 0
    %583 = vmatpush1.bf16.msra.mxu0 0
    %584 = vmatprep.subr.bf16.mxu0 0
    %585 = vmatpush1.bf16.msra.mxu0 0
    %586 = vmatprep.subr.bf16.mxu0 0
    %587 = vmatpush1.bf16.msra.mxu0 0
    %588 = vmatprep.subr.bf16.mxu0 0
    %589 = vmatpush1.bf16.msra.mxu0 0
    %590 = vmatprep.mubr.bf16.mxu0 0
    %591 = vmatmul.mubr.bf16.gmra.mrb[0].mxu0 %v494
    %v592 = vpop.f32.mrb[0].mxu0
    %v593 = vadd.f32 %v400, %v592
    %v594 = vpop.f32.mrb[0].mxu0
    %v595 = vpop.f32.mrb[0].mxu0
    %v596 = vadd.f32 %v403, %v595
    %v597 = vpop.f32.mrb[0].mxu0
    %598 = vmatprep.mubr.bf16.mxu0 0
    %599 = vmatmul.mubr.bf16.gmra.mrb[0].mxu0 %v495
    %v600 = vpop.f32.mrb[0].mxu0
    %v601 = vadd.f32 %v408, %v600
    %v602 = vpop.f32.mrb[0].mxu0
    %v603 = vpop.f32.mrb[0].mxu0
    %v604 = vadd.f32 %v411, %v603
    %v605 = vpop.f32.mrb[0].mxu0
    %606 = vmatprep.mubr.bf16.mxu0 0
    %607 = vmatmul.mubr.bf16.gmra.mrb[0].mxu0 %v496
    %v608 = vpop.f32.mrb[0].mxu0
    %v609 = vadd.f32 %v416, %v608
    %v610 = vpop.f32.mrb[0].mxu0
    %v611 = vpop.f32.mrb[0].mxu0
    %v612 = vadd.f32 %v419, %v611
    %v613 = vpop.f32.mrb[0].mxu0
    %614 = vmatprep.mubr.bf16.mxu0 0
    %615 = vmatmul.mubr.bf16.gmra.mrb[0].mxu0 %v497
    %v616 = vpop.f32.mrb[0].mxu0
    %v617 = vadd.f32 %v424, %v616
    %v618 = vpop.f32.mrb[0].mxu0
    %v619 = vpop.f32.mrb[0].mxu0
    %v620 = vadd.f32 %v427, %v619
    %v621 = vpop.f32.mrb[0].mxu0
    %622 = vmatprep.mubr.bf16.mxu0 0
    %623 = vmatmul.mubr.bf16.gmra.mrb[0].mxu0 %v498
    %v624 = vpop.f32.mrb[0].mxu0
    %v625 = vadd.f32 %v432, %v624
    %v626 = vpop.f32.mrb[0].mxu0
    %v627 = vpop.f32.mrb[0].mxu0
    %v628 = vadd.f32 %v435, %v627
    %v629 = vpop.f32.mrb[0].mxu0
    %630 = vmatprep.mubr.bf16.mxu0 0
    %631 = vmatmul.mubr.bf16.gmra.mrb[0].mxu0 %v499
    %v632 = vpop.f32.mrb[0].mxu0
    %v633 = vadd.f32 %v440, %v632
    %v634 = vpop.f32.mrb[0].mxu0
    %v635 = vpop.f32.mrb[0].mxu0
    %v636 = vadd.f32 %v443, %v635
    %v637 = vpop.f32.mrb[0].mxu0
    %638 = vmatprep.mubr.bf16.mxu0 0
    %639 = vmatmul.mubr.bf16.gmra.mrb[0].mxu0 %v500
    %v640 = vpop.f32.mrb[0].mxu0
    %v641 = vadd.f32 %v448, %v640
    %v642 = vpop.f32.mrb[0].mxu0
    %v643 = vpop.f32.mrb[0].mxu0
    %v644 = vadd.f32 %v451, %v643
    %v645 = vpop.f32.mrb[0].mxu0
    %646 = vmatprep.mubr.bf16.mxu0 0
    %647 = vmatmul.mubr.bf16.gmra.mrb[0].mxu0 %v501
    %v648 = vpop.f32.mrb[0].mxu0
    %v649 = vadd.f32 %v456, %v648
    %v650 = vpop.f32.mrb[0].mxu0
    %v651 = vpop.f32.mrb[0].mxu0
    %v652 = vadd.f32 %v459, %v651
    %v653 = vpop.f32.mrb[0].mxu0
    %654 = vdwg.mxu0
    %v655 = vld [vmem:[%s6] sm:$0x1]
    %v657 = vlaneseq
    %v658 = vshrl.u32 %v657, 7
    %v659 = vsub.s32 0, %v658
    %v660 = vrot.slane %v655, %v659
    %v662 = vadd.f32 %v593, %v660
    %v663 = vadd.f32 %v596, %v660
    %v664 = vadd.f32 %v601, %v660
    %v665 = vadd.f32 %v604, %v660
    %v666 = vadd.f32 %v609, %v660
    %v667 = vadd.f32 %v612, %v660
    %v668 = vadd.f32 %v617, %v660
    %v669 = vadd.f32 %v620, %v660
    %v670 = vadd.f32 %v625, %v660
    %v671 = vadd.f32 %v628, %v660
    %v672 = vadd.f32 %v633, %v660
    %v673 = vadd.f32 %v636, %v660
    %v674 = vadd.f32 %v641, %v660
    %v675 = vadd.f32 %v644, %v660
    %v676 = vadd.f32 %v649, %v660
    %v677 = vadd.f32 %v652, %v660
    %v678 = vmax.f32 %v662, 0.0
    %v679 = vmax.f32 %v663, 0.0
    %v680 = vmax.f32 %v664, 0.0
    %v681 = vmax.f32 %v665, 0.0
    %v682 = vmax.f32 %v666, 0.0
    %v683 = vmax.f32 %v667, 0.0
    %v684 = vmax.f32 %v668, 0.0
    %v685 = vmax.f32 %v669, 0.0
    %v686 = vmax.f32 %v670, 0.0
    %v687 = vmax.f32 %v671, 0.0
    %v688 = vmax.f32 %v672, 0.0
    %v689 = vmax.f32 %v673, 0.0
    %v690 = vmax.f32 %v674, 0.0
    %v691 = vmax.f32 %v675, 0.0
    %v692 = vmax.f32 %v676, 0.0
    %v693 = vmax.f32 %v677, 0.0
    %694 = vst [vmem:[#allocation8] sm:$0xff] %v678
    %695 = vst [vmem:[#allocation8 + $0x8] sm:$0xff] %v679
    %696 = vst [vmem:[#allocation8 + $0x10] sm:$0xff] %v680
    %697 = vst [vmem:[#allocation8 + $0x18] sm:$0xff] %v681
    %698 = vst [vmem:[#allocation8 + $0x20] sm:$0xff] %v682
    %699 = vst [vmem:[#allocation8 + $0x28] sm:$0xff] %v683
    %700 = vst [vmem:[#allocation8 + $0x30] sm:$0xff] %v684
    %701 = vst [vmem:[#allocation8 + $0x38] sm:$0xff] %v685
    %702 = vst [vmem:[#allocation8 + $0x40] sm:$0xff] %v686
    %703 = vst [vmem:[#allocation8 + $0x48] sm:$0xff] %v687
    %704 = vst [vmem:[#allocation8 + $0x50] sm:$0xff] %v688
    %705 = vst [vmem:[#allocation8 + $0x58] sm:$0xff] %v689
    %706 = vst [vmem:[#allocation8 + $0x60] sm:$0xff] %v690
    %707 = vst [vmem:[#allocation8 + $0x68] sm:$0xff] %v691
    %708 = vst [vmem:[#allocation8 + $0x70] sm:$0xff] %v692
    %709 = vst [vmem:[#allocation8 + $0x78] sm:$0xff] %v693
    // Predicated region
    $region42: #{tpu_custom_call.1} parent=1 // pred_check
      _
    $region43: #{tpu_custom_call.1} parent=1 // pred_check_branch
      %711 = sbr.rel (0) target = $region45
    $region44: #{tpu_custom_call.1} parent=1 // pred_region
      %s713 = ssub.s32 2048, 2048
      %714 = vsyncadd [#allocation4], %s713
      %s715 = sshll.u32 [#allocation8], 4
      %s716 = int_to_ptr.vmem [resolvable:$true] %s715
      %721 = dma.vmem_to_hbm [thread:$0]  %s716, 2048, %s7, [#allocation4], 128, 128, 8
    $region45: #{tpu_custom_call.1} parent=1 // pred_fallthru
      _
    // Predicated region
    $region46: #{tpu_custom_call.1} parent=1 // pred_check
      _
    $region47: #{tpu_custom_call.1} parent=1 // pred_check_branch
      %723 = sbr.rel (0) target = $region49
    $region48: #{tpu_custom_call.1} parent=1 // pred_region
      %724 = dma.done [#allocation4], 2048
    $region49: #{tpu_custom_call.1} parent=1 // pred_fallthru
      _
    %725 = vsyncpa [#allocation3], 1
    %726 = vsyncpa [#allocation6], 1
    %727 = vsyncpa [#allocation4], 1

</llo_original>
